<compile_context>
chip_gen: v5e
topology: v5e:2x2
jax: 0.10.0
libtpu: 0.0.40
codegen_flags: <defaults>
</compile_context>

<pallas_src>
import jax
import jax.numpy as jnp
from jax import lax
from jax.experimental import pallas as pl
from jax.experimental.pallas import tpu as pltpu


def _make_mask_cid_kernel(C, D, has_sel):
    """Build the kernel body, specialized on capsule shape and target presence."""

    def kernel(*refs):
        if has_sel:
            x_ref, q_ref, p_ref, cap_ref, sel_ref, out_ref = refs
        else:
            x_ref, q_ref, p_ref, cap_ref, out_ref = refs
            sel_ref = None

        x = x_ref[...]                                   # (TB, C*D) original dtype
        TB = x.shape[0]
        xf = x.astype(jnp.float32)

        # Per-capsule squared lengths via a tiny MXU matmul with a block-diagonal
        # ones matrix:  sq[b, c] = sum_d x[b, c, d]^2.  sqrt only feeds `classes`.
        sq = jnp.dot(xf * xf, q_ref[...],
                     preferred_element_type=jnp.float32,
                     precision=lax.Precision.HIGHEST)    # (TB, C) f32
        classes = jnp.sqrt(sq)

        # argmax over capsules, first index on ties (matches torch.max).
        cap_iota = lax.broadcasted_iota(jnp.int32, (TB, C), 1)
        maxv = jnp.max(sq, axis=-1, keepdims=True)
        idx = jnp.min(jnp.where(sq >= maxv, cap_iota, C), axis=-1, keepdims=True)
        idx = jnp.minimum(idx, C - 1).astype(jnp.int32)  # all-NaN row guard

        sel = sel_ref[...] if has_sel else idx           # (TB, 1) int32

        # Masked gather: zero every lane whose capsule index != sel (NaN-safe
        # `where`, original dtype), then collapse the capsule axis with a
        # stacked-identity MXU matmul (sum of zeros + selected value -> exact).
        keep = cap_ref[...] == sel                       # (1,CD)==(TB,1) -> (TB,CD)
        xm = jnp.where(keep, x, jnp.zeros_like(x))
        masked = jnp.dot(xm, p_ref[...],
                         preferred_element_type=jnp.float32,
                         precision=lax.Precision.HIGHEST)   # (TB, D) f32

        # Single lane-dense output slab: [masked | classes | idx | zero pad].
        out_ref[...] = jnp.zeros_like(out_ref)
        out_ref[:, 0:D] = masked
        out_ref[:, D:D + C] = classes
        out_ref[:, D + C:D + C + 1] = idx.astype(jnp.float32)

    return kernel


def mask_cid(x, target=None, *, block_batch=None):
    """x: (B, C, D). target: optional (B, C) labels/one-hot.

    Returns (masked (B,1,D), indices (B,), classes (B,C)) like the torch module.
    """
    B, C, D = x.shape
    CD = C * D
    OUT_W = ((D + C + 1 + 127) // 128) * 128             # lane-dense output slab

    x2 = x.reshape(B, CD)                                # free reshape (contiguous)

    # Constant projection matrices / lane->capsule map (resident in VMEM: their
    # block index never changes across grid steps, so they are DMA'd once).
    q_mat = jnp.repeat(jnp.eye(C, dtype=jnp.float32), D, axis=0)      # (CD, C)
    p_mat = jnp.tile(jnp.eye(D, dtype=x.dtype), (C, 1))               # (CD, D)
    cap_of_lane = jnp.repeat(jnp.arange(C, dtype=jnp.int32), D).reshape(1, CD)

    has_sel = target is not None
    if has_sel:
        sel = jnp.argmax(target, axis=-1).astype(jnp.int32).reshape(B, 1)

    # --- batch tile sized from the PADDED VMEM footprint (lanes -> mult of 128,
    # double-buffered), targeting ~8 MiB so default scoped VMEM fits on all gens.
    itemsize = jnp.dtype(x.dtype).itemsize
    pad128 = lambda n: ((n + 127) // 128) * 128
    row_bytes = (pad128(CD) * itemsize                   # x block
                 + OUT_W * 4                             # output slab
                 + (pad128(1) * 4 if has_sel else 0))    # sel block (target path)
    budget = 8 * 1024 * 1024
    if block_batch is None:
        tb = max(8, (budget // (2 * row_bytes)) // 8 * 8)
        # v7x megacore: keep >= 2 grid steps so "parallel" can shard across TCs.
        half8 = ((-(-B // 2) + 7) // 8) * 8
        if B > 8:
            tb = min(tb, half8)
    else:
        tb = block_batch
    if tb >= B:
        tb = B                                           # full block: layout-legal
    else:
        tb = max(8, (tb // 8) * 8)                       # sublane dim multiple of 8

    grid = (pl.cdiv(B, tb),)

    in_specs = [
        pl.BlockSpec((tb, CD), lambda i: (i, 0)),        # x (flattened)
        pl.BlockSpec((CD, C), lambda i: (0, 0)),         # Q (resident constant)
        pl.BlockSpec((CD, D), lambda i: (0, 0)),         # P (resident constant)
        pl.BlockSpec((1, CD), lambda i: (0, 0)),         # lane->capsule map
    ]
    args = [x2, q_mat, p_mat, cap_of_lane]
    if has_sel:
        in_specs.append(pl.BlockSpec((tb, 1), lambda i: (i, 0)))
        args.append(sel)

    flops = B * (3 * CD + 2 * CD * C + 2 * CD * D)
    bytes_accessed = (B * CD * itemsize + CD * (C + D + 1) * 4
                      + B * OUT_W * 4 + (B * 4 if has_sel else 0))
    cost = pl.CostEstimate(flops=flops, transcendentals=B * C,
                           bytes_accessed=bytes_accessed)

    slab = pl.pallas_call(
        _make_mask_cid_kernel(C, D, has_sel),
        out_shape=jax.ShapeDtypeStruct((B, OUT_W), jnp.float32),
        grid=grid,
        in_specs=in_specs,
        out_specs=pl.BlockSpec((tb, OUT_W), lambda i: (i, 0)),
        compiler_params=pltpu.CompilerParams(
            dimension_semantics=("parallel",),
            vmem_limit_bytes=32 * 1024 * 1024),
        cost_estimate=cost,
    )(*args)

    masked = slab[:, :D].astype(x.dtype)[:, None, :]     # (B, 1, D)
    classes = slab[:, D:D + C]                           # (B, C) f32
    indices = slab[:, D + C].astype(jnp.int32)           # (B,)
    return masked, indices, classes


def _reference(x, target=None):
    classes = jnp.sqrt(jnp.sum(x * x, axis=2))
    sel = jnp.argmax(classes, axis=-1) if target is None else jnp.argmax(target, axis=-1)
    masked = x[jnp.arange(x.shape[0]), sel][:, None, :]
    indices = jnp.argmax(classes, axis=-1)   # torch returns this in both branches
    return masked, indices, classes


if __name__ == "__main__":
    key = jax.random.PRNGKey(0)
    B, C, D = 2, 4, 16                       # batch, num_capsules(classes), capsule dim
    kx, kx2 = jax.random.split(key)
    x = jax.random.normal(kx, (B, C, D), dtype=jnp.float32)

    # --- target=None path ---
    masked, idx, classes = mask_cid(x)
    jax.block_until_ready((masked, idx, classes))
    m_ref, i_ref, c_ref = _reference(x)
    assert masked.shape == (B, 1, D) and idx.shape == (B,) and classes.shape == (B, C)
    assert jnp.allclose(masked, m_ref, atol=1e-5)
    assert jnp.array_equal(idx, i_ref.astype(idx.dtype))
    assert jnp.allclose(classes, c_ref, atol=1e-5)

    # --- target provided path ---
    target = jax.nn.one_hot(jnp.array([3, 1]), C, dtype=jnp.float32)
    masked_t, idx_t, classes_t = mask_cid(x, target)
    jax.block_until_ready((masked_t, idx_t, classes_t))
    m_ref_t, i_ref_t, c_ref_t = _reference(x, target)
    assert jnp.allclose(masked_t, m_ref_t, atol=1e-5)
    assert jnp.array_equal(idx_t, i_ref_t.astype(idx_t.dtype))
    assert jnp.allclose(classes_t, c_ref_t, atol=1e-5)

    # --- larger batch: auto tile (>=2 grid steps) and explicit ragged tiling ---
    B2, C2, D2 = 20, 10, 16
    x2 = jax.random.normal(kx2, (B2, C2, D2), dtype=jnp.float32)
    m2, i2, c2 = mask_cid(x2)                    # auto: tb=16, grid of 2 (ragged tail)
    jax.block_until_ready((m2, i2, c2))
    m2_ref, i2_ref, c2_ref = _reference(x2)
    assert jnp.allclose(m2, m2_ref, atol=1e-5)
    assert jnp.array_equal(i2, i2_ref.astype(i2.dtype))
    assert jnp.allclose(c2, c2_ref, atol=1e-5)

    m3, i3, c3 = mask_cid(x2, block_batch=8)     # explicit: grid of 3, last block ragged
    jax.block_until_ready((m3, i3, c3))
    assert jnp.allclose(m3, m2_ref, atol=1e-5)
    assert jnp.array_equal(i3, i2_ref.astype(i3.dtype))
    assert jnp.allclose(c3, c2_ref, atol=1e-5)

    print("KERNEL_OK")
</pallas_src>

<mosaic_0001>
module attributes {stable_mosaic.version = 11 : i64} {
  func.func @kernel(%arg0: i32, %arg1: memref<2x64xf32, #tpu.memory_space<vmem>>, %arg2: memref<64x4xf32, #tpu.memory_space<vmem>>, %arg3: memref<64x16xf32, #tpu.memory_space<vmem>>, %arg4: memref<1x64xi32, #tpu.memory_space<vmem>>, %arg5: memref<2x128xf32, #tpu.memory_space<vmem>>) attributes {dimension_semantics = [#tpu.dimension_semantics<parallel>], iteration_bounds = array<i64: 1>, scalar_prefetch = 0 : i64, scratch_operands = 0 : i64, tpu.core_type = #tpu.core_type<tc>, window_params = [{transform_indices = @transform_0, window_bounds = array<i64: 2, 64>}, {pipeline_mode = #tpu.pipeline_mode<synchronous>, transform_indices = @transform_1, window_bounds = array<i64: 64, 4>}, {pipeline_mode = #tpu.pipeline_mode<synchronous>, transform_indices = @transform_2, window_bounds = array<i64: 64, 16>}, {pipeline_mode = #tpu.pipeline_mode<synchronous>, transform_indices = @transform_3, window_bounds = array<i64: 1, 64>}, {transform_indices = @transform_4, window_bounds = array<i64: 2, 128>}]} {
    %c0 = arith.constant 0 : index
    %c0_0 = arith.constant 0 : index
    %0 = vector.load %arg1[%c0, %c0_0] : memref<2x64xf32, #tpu.memory_space<vmem>>, vector<2x64xf32>
    %1 = arith.mulf %0, %0 : vector<2x64xf32>
    %c0_1 = arith.constant 0 : index
    %c0_2 = arith.constant 0 : index
    %2 = vector.load %arg2[%c0_1, %c0_2] : memref<64x4xf32, #tpu.memory_space<vmem>>, vector<64x4xf32>
    %cst = arith.constant dense<0.000000e+00> : vector<2x4xf32>
    %3 = tpu.matmul %1, %2, %cst {dimension_numbers = #tpu.dot_dimension_numbers<[1], [0], [0], [1], [0, 0, 1, 1], [], []>, precision = #tpu.contract_precision<fp32>} : vector<2x64xf32>, vector<64x4xf32>, vector<2x4xf32> -> vector<2x4xf32>
    %4 = math.sqrt %3 : vector<2x4xf32>
    %5 = tpu.iota {dimensions = array<i32: 1>} : vector<2x4xi32>
    %cst_3 = arith.constant dense<0xFF800000> : vector<2xf32>
    %6 = vector.multi_reduction <maximumf>, %3, %cst_3 [1] : vector<2x4xf32> to vector<2xf32>
    %7 = vector.shape_cast %6 : vector<2xf32> to vector<2x1xf32>
    %8 = vector.broadcast %7 : vector<2x1xf32> to vector<2x4xf32>
    %9 = arith.cmpf oge, %3, %8 : vector<2x4xf32>
    %c4_i32 = arith.constant 4 : i32
    %10 = vector.broadcast %c4_i32 : i32 to vector<2x4xi32>
    %11 = arith.select %9, %5, %10 : vector<2x4xi1>, vector<2x4xi32>
    %cst_4 = arith.constant dense<2147483647> : vector<2xi32>
    %12 = vector.multi_reduction <minsi>, %11, %cst_4 [1] : vector<2x4xi32> to vector<2xi32>
    %13 = vector.shape_cast %12 : vector<2xi32> to vector<2x1xi32>
    %c3_i32 = arith.constant 3 : i32
    %14 = vector.broadcast %c3_i32 : i32 to vector<2x1xi32>
    %15 = arith.minsi %13, %14 : vector<2x1xi32>
    %c0_5 = arith.constant 0 : index
    %c0_6 = arith.constant 0 : index
    %16 = vector.load %arg4[%c0_5, %c0_6] : memref<1x64xi32, #tpu.memory_space<vmem>>, vector<1x64xi32>
    %17 = vector.broadcast %16 : vector<1x64xi32> to vector<2x64xi32>
    %18 = vector.broadcast %15 : vector<2x1xi32> to vector<2x64xi32>
    %19 = arith.cmpi eq, %17, %18 : vector<2x64xi32>
    %cst_7 = arith.constant 0.000000e+00 : f32
    %20 = vector.broadcast %cst_7 : f32 to vector<2x64xf32>
    %21 = arith.select %19, %0, %20 : vector<2x64xi1>, vector<2x64xf32>
    %c0_8 = arith.constant 0 : index
    %c0_9 = arith.constant 0 : index
    %22 = vector.load %arg3[%c0_8, %c0_9] : memref<64x16xf32, #tpu.memory_space<vmem>>, vector<64x16xf32>
    %cst_10 = arith.constant dense<0.000000e+00> : vector<2x16xf32>
    %23 = tpu.matmul %21, %22, %cst_10 {dimension_numbers = #tpu.dot_dimension_numbers<[1], [0], [0], [1], [0, 0, 1, 1], [], []>, precision = #tpu.contract_precision<fp32>} : vector<2x64xf32>, vector<64x16xf32>, vector<2x16xf32> -> vector<2x16xf32>
    %cst_11 = arith.constant 0.000000e+00 : f32
    %24 = vector.broadcast %cst_11 : f32 to vector<2x128xf32>
    %c0_12 = arith.constant 0 : index
    %c0_13 = arith.constant 0 : index
    %25 = vector.load %arg5[%c0_12, %c0_13] : memref<2x128xf32, #tpu.memory_space<vmem>>, vector<2x128xf32>
    tpu.vector_store %arg5[%c0_12, %c0_13], %24 {strides = array<i32>} : memref<2x128xf32, #tpu.memory_space<vmem>>, vector<2x128xf32>,
    %c0_14 = arith.constant 0 : index
    %c0_15 = arith.constant 0 : index
    %26 = vector.load %arg5[%c0_14, %c0_15] : memref<2x128xf32, #tpu.memory_space<vmem>>, vector<2x16xf32>
    tpu.vector_store %arg5[%c0_14, %c0_15], %23 {strides = array<i32>} : memref<2x128xf32, #tpu.memory_space<vmem>>, vector<2x16xf32>,
    %c0_16 = arith.constant 0 : index
    %c16 = arith.constant 16 : index
    %27 = vector.load %arg5[%c0_16, %c16] : memref<2x128xf32, #tpu.memory_space<vmem>>, vector<2x4xf32>
    tpu.vector_store %arg5[%c0_16, %c16], %4 {strides = array<i32>} : memref<2x128xf32, #tpu.memory_space<vmem>>, vector<2x4xf32>,
    %28 = arith.sitofp %15 : vector<2x1xi32> to vector<2x1xf32>
    %c0_17 = arith.constant 0 : index
    %c20 = arith.constant 20 : index
    %29 = vector.load %arg5[%c0_17, %c20] : memref<2x128xf32, #tpu.memory_space<vmem>>, vector<2x1xf32>
    tpu.vector_store %arg5[%c0_17, %c20], %28 {strides = array<i32>} : memref<2x128xf32, #tpu.memory_space<vmem>>, vector<2x1xf32>,
    return
  }
  func.func @transform_0(%arg0: i32) -> (i32, i32) {
    %c0_i32 = arith.constant 0 : i32
    %c0_i32_0 = arith.constant 0 : i32
    return %arg0, %c0_i32 : i32, i32
  }
  func.func @transform_1(%arg0: i32) -> (i32, i32) {
    %c0_i32 = arith.constant 0 : i32
    %c0_i32_0 = arith.constant 0 : i32
    %c0_i32_1 = arith.constant 0 : i32
    return %c0_i32, %c0_i32_0 : i32, i32
  }
  func.func @transform_2(%arg0: i32) -> (i32, i32) {
    %c0_i32 = arith.constant 0 : i32
    %c0_i32_0 = arith.constant 0 : i32
    %c0_i32_1 = arith.constant 0 : i32
    return %c0_i32, %c0_i32_0 : i32, i32
  }
  func.func @transform_3(%arg0: i32) -> (i32, i32) {
    %c0_i32 = arith.constant 0 : i32
    %c0_i32_0 = arith.constant 0 : i32
    %c0_i32_1 = arith.constant 0 : i32
    return %c0_i32, %c0_i32_0 : i32, i32
  }
  func.func @transform_4(%arg0: i32) -> (i32, i32) {
    %c0_i32 = arith.constant 0 : i32
    %c0_i32_0 = arith.constant 0 : i32
    return %arg0, %c0_i32 : i32, i32
  }
}

</mosaic_0001>

<llo_original>
// kernel: tpu_custom_call.1
$region0: #{tpu_custom_call.1}
  #allocation0 [shape = 'u32[]', space=smem, size = 0x4, offset = 0x4, fixed_abs, tag = 'smem constant byte address 0x4 - core index']
  #allocation1 [shape = 'u32[72,128]{1,0:T(1,128)}', space=vmem, size = 0x9000, scoped, tag = 'internal scratch']
  %s0 = inlined_call_operand.vmem [shape: f32[2,64], index: 0, kind: input, shape index: {}]
  %s1 = inlined_call_operand.vmem [shape: f32[64,4], index: 1, kind: input, shape index: {}]
  %s2 = inlined_call_operand.vmem [shape: f32[64,16], index: 2, kind: input, shape index: {}]
  %s3 = inlined_call_operand.vmem [shape: s32[1,64], index: 3, kind: input, shape index: {}]
  %s4 = inlined_call_operand.hbm [shape: f32[2,128], index: 4, kind: output, shape index: {}]
  %s5 = sld [smem:[#allocation0]]
  $region26: #{tpu_custom_call.1} parent=0
    _
  %s7 = ssub.s32 1, %s5
  %s8 = scalar_select 0, %s7, %s5
  $region1: #{tpu_custom_call.1} parent=0
    #allocation2 [shape = 'u8[1024]{0}', space=vmem, size = 0x400, scoped, tag = 'output window, operand 0, single buffered']
    #allocation3 [shape = 's32[1]{0}', space=sflag, size = 0x4, scoped, tag = 'scoped memory for tpu_custom_call.1']
    %9 = vsyncpa [#allocation3], 0
    // Predicated region
    $region2: #{tpu_custom_call.1} parent=1 // pred_check
      _
    $region3: #{tpu_custom_call.1} parent=1 // pred_check_branch
      %11 = sbr.rel (0) target = $region5
    $region4: #{tpu_custom_call.1} parent=1 // pred_region
      _
    $region5: #{tpu_custom_call.1} parent=1 // pred_fallthru
      _
    // Predicated region
    $region6: #{tpu_custom_call.1} parent=1 // pred_check
      _
    $region7: #{tpu_custom_call.1} parent=1 // pred_check_branch
      %13 = sbr.rel (0) target = $region9
    $region8: #{tpu_custom_call.1} parent=1 // pred_region
      _
    $region9: #{tpu_custom_call.1} parent=1 // pred_fallthru
      _
    // Predicated region
    $region10: #{tpu_custom_call.1} parent=1 // pred_check
      _
    $region11: #{tpu_custom_call.1} parent=1 // pred_check_branch
      %15 = sbr.rel (0) target = $region13
    $region12: #{tpu_custom_call.1} parent=1 // pred_region
      _
    $region13: #{tpu_custom_call.1} parent=1 // pred_fallthru
      _
    // Predicated region
    $region14: #{tpu_custom_call.1} parent=1 // pred_check
      _
    $region15: #{tpu_custom_call.1} parent=1 // pred_check_branch
      %17 = sbr.rel (0) target = $region17
    $region16: #{tpu_custom_call.1} parent=1 // pred_region
      _
    $region17: #{tpu_custom_call.1} parent=1 // pred_fallthru
      _
    %v18 = vld [vmem:[%s0] sm:$0x3]
    %v19 = vmul.f32 %v18, %v18
    %v20 = vld [vmem:[%s1] sm:$0xff]
    %v21 = vld [vmem:[%s1 + $0x8] sm:$0xff]
    %v22 = vld [vmem:[%s1 + $0x10] sm:$0xff]
    %v23 = vld [vmem:[%s1 + $0x18] sm:$0xff]
    %v24 = vld [vmem:[%s1 + $0x20] sm:$0xff]
    %v25 = vld [vmem:[%s1 + $0x28] sm:$0xff]
    %v26 = vld [vmem:[%s1 + $0x30] sm:$0xff]
    %v27 = vld [vmem:[%s1 + $0x38] sm:$0xff]
    %vm28 = vcmask 523264
    %v30 = vsel %vm28, %v19, 0
    %32 = vmatpush.msra.mxu0 0.0
    %33 = vmatpush.msra.mxu0 0.0
    %34 = vmatpush.msra.mxu0 0.0
    %35 = vmatpush.msra.mxu0 0.0
    %36 = vmatpush.msra.mxu0 0.0
    %37 = vmatpush.msra.mxu0 0.0
    %38 = vmatpush.msra.mxu0 0.0
    %39 = vmatpush.msra.mxu0 0.0
    %v40 = vand.u32 %v27, 4294901760
    %41 = vmatpush.msra.mxu0 %v40
    %v42 = vand.u32 %v26, 4294901760
    %43 = vmatpush.msra.mxu0 %v42
    %v44 = vand.u32 %v25, 4294901760
    %45 = vmatpush.msra.mxu0 %v44
    %v46 = vand.u32 %v24, 4294901760
    %47 = vmatpush.msra.mxu0 %v46
    %v48 = vand.u32 %v23, 4294901760
    %49 = vmatpush.msra.mxu0 %v48
    %v50 = vand.u32 %v22, 4294901760
    %51 = vmatpush.msra.mxu0 %v50
    %v52 = vand.u32 %v21, 4294901760
    %53 = vmatpush.msra.mxu0 %v52
    %v54 = vand.u32 %v20, 4294901760
    %55 = vmatpush.msra.mxu0 %v54
    %v56 = vand.u32 %v30, 4294901760
    %v57 = vsub.f32 %v30, %v56
    %v58 = vand.u32 %v57, 4294901760
    %v59 = vsub.f32 %v57, %v58
    %v60 = vand.u32 %v59, 4294901760
    %61 = vmatmul.f32.gmra.mxu0 %v60
    %v62 = vpop.f32.mrf.mxu0
    %v63 = vadd.f32 0.0, %v62
    %64 = vdwg.mxu0
    %65 = vmatpush.msra.mxu0 0.0
    %66 = vmatpush.msra.mxu0 0.0
    %67 = vmatpush.msra.mxu0 0.0
    %68 = vmatpush.msra.mxu0 0.0
    %69 = vmatpush.msra.mxu0 0.0
    %70 = vmatpush.msra.mxu0 0.0
    %71 = vmatpush.msra.mxu0 0.0
    %72 = vmatpush.msra.mxu0 0.0
    %v73 = vand.u32 %v27, 4294901760
    %v74 = vsub.f32 %v27, %v73
    %v75 = vand.u32 %v74, 4294901760
    %v76 = vsub.f32 %v74, %v75
    %v77 = vand.u32 %v76, 4294901760
    %78 = vmatpush.msra.mxu0 %v77
    %v79 = vand.u32 %v26, 4294901760
    %v80 = vsub.f32 %v26, %v79
    %v81 = vand.u32 %v80, 4294901760
    %v82 = vsub.f32 %v80, %v81
    %v83 = vand.u32 %v82, 4294901760
    %84 = vmatpush.msra.mxu0 %v83
    %v85 = vand.u32 %v25, 4294901760
    %v86 = vsub.f32 %v25, %v85
    %v87 = vand.u32 %v86, 4294901760
    %v88 = vsub.f32 %v86, %v87
    %v89 = vand.u32 %v88, 4294901760
    %90 = vmatpush.msra.mxu0 %v89
    %v91 = vand.u32 %v24, 4294901760
    %v92 = vsub.f32 %v24, %v91
    %v93 = vand.u32 %v92, 4294901760
    %v94 = vsub.f32 %v92, %v93
    %v95 = vand.u32 %v94, 4294901760
    %96 = vmatpush.msra.mxu0 %v95
    %v97 = vand.u32 %v23, 4294901760
    %v98 = vsub.f32 %v23, %v97
    %v99 = vand.u32 %v98, 4294901760
    %v100 = vsub.f32 %v98, %v99
    %v101 = vand.u32 %v100, 4294901760
    %102 = vmatpush.msra.mxu0 %v101
    %v103 = vand.u32 %v22, 4294901760
    %v104 = vsub.f32 %v22, %v103
    %v105 = vand.u32 %v104, 4294901760
    %v106 = vsub.f32 %v104, %v105
    %v107 = vand.u32 %v106, 4294901760
    %108 = vmatpush.msra.mxu0 %v107
    %v109 = vand.u32 %v21, 4294901760
    %v110 = vsub.f32 %v21, %v109
    %v111 = vand.u32 %v110, 4294901760
    %v112 = vsub.f32 %v110, %v111
    %v113 = vand.u32 %v112, 4294901760
    %114 = vmatpush.msra.mxu0 %v113
    %v115 = vand.u32 %v20, 4294901760
    %v116 = vsub.f32 %v20, %v115
    %v117 = vand.u32 %v116, 4294901760
    %v118 = vsub.f32 %v116, %v117
    %v119 = vand.u32 %v118, 4294901760
    %120 = vmatpush.msra.mxu0 %v119
    %v121 = vand.u32 %v30, 4294901760
    %122 = vmatmul.f32.gmra.mxu0 %v121
    %v123 = vpop.f32.mrf.mxu0
    %v124 = vadd.f32 %v63, %v123
    %125 = vdwg.mxu0
    %126 = vmatpush.msra.mxu0 0.0
    %127 = vmatpush.msra.mxu0 0.0
    %128 = vmatpush.msra.mxu0 0.0
    %129 = vmatpush.msra.mxu0 0.0
    %130 = vmatpush.msra.mxu0 0.0
    %131 = vmatpush.msra.mxu0 0.0
    %132 = vmatpush.msra.mxu0 0.0
    %133 = vmatpush.msra.mxu0 0.0
    %v134 = vand.u32 %v27, 4294901760
    %v135 = vsub.f32 %v27, %v134
    %136 = vmatpush.msra.mxu0 %v135
    %v137 = vand.u32 %v26, 4294901760
    %v138 = vsub.f32 %v26, %v137
    %139 = vmatpush.msra.mxu0 %v138
    %v140 = vand.u32 %v25, 4294901760
    %v141 = vsub.f32 %v25, %v140
    %142 = vmatpush.msra.mxu0 %v141
    %v143 = vand.u32 %v24, 4294901760
    %v144 = vsub.f32 %v24, %v143
    %145 = vmatpush.msra.mxu0 %v144
    %v146 = vand.u32 %v23, 4294901760
    %v147 = vsub.f32 %v23, %v146
    %148 = vmatpush.msra.mxu0 %v147
    %v149 = vand.u32 %v22, 4294901760
    %v150 = vsub.f32 %v22, %v149
    %151 = vmatpush.msra.mxu0 %v150
    %v152 = vand.u32 %v21, 4294901760
    %v153 = vsub.f32 %v21, %v152
    %154 = vmatpush.msra.mxu0 %v153
    %v155 = vand.u32 %v20, 4294901760
    %v156 = vsub.f32 %v20, %v155
    %157 = vmatpush.msra.mxu0 %v156
    %v158 = vand.u32 %v30, 4294901760
    %v159 = vsub.f32 %v30, %v158
    %160 = vmatmul.f32.gmra.mxu0 %v159
    %v161 = vpop.f32.mrf.mxu0
    %v162 = vadd.f32 %v124, %v161
    %163 = vdwg.mxu0
    %164 = vmatpush.msra.mxu0 0.0
    %165 = vmatpush.msra.mxu0 0.0
    %166 = vmatpush.msra.mxu0 0.0
    %167 = vmatpush.msra.mxu0 0.0
    %168 = vmatpush.msra.mxu0 0.0
    %169 = vmatpush.msra.mxu0 0.0
    %170 = vmatpush.msra.mxu0 0.0
    %171 = vmatpush.msra.mxu0 0.0
    %v172 = vand.u32 %v27, 4294901760
    %173 = vmatpush.msra.mxu0 %v172
    %v174 = vand.u32 %v26, 4294901760
    %175 = vmatpush.msra.mxu0 %v174
    %v176 = vand.u32 %v25, 4294901760
    %177 = vmatpush.msra.mxu0 %v176
    %v178 = vand.u32 %v24, 4294901760
    %179 = vmatpush.msra.mxu0 %v178
    %v180 = vand.u32 %v23, 4294901760
    %181 = vmatpush.msra.mxu0 %v180
    %v182 = vand.u32 %v22, 4294901760
    %183 = vmatpush.msra.mxu0 %v182
    %v184 = vand.u32 %v21, 4294901760
    %185 = vmatpush.msra.mxu0 %v184
    %v186 = vand.u32 %v20, 4294901760
    %187 = vmatpush.msra.mxu0 %v186
    %v188 = vand.u32 %v30, 4294901760
    %v189 = vsub.f32 %v30, %v188
    %v190 = vand.u32 %v189, 4294901760
    %191 = vmatmul.f32.gmra.mxu0 %v190
    %v192 = vpop.f32.mrf.mxu0
    %v193 = vadd.f32 %v162, %v192
    %194 = vdwg.mxu0
    %195 = vmatpush.msra.mxu0 0.0
    %196 = vmatpush.msra.mxu0 0.0
    %197 = vmatpush.msra.mxu0 0.0
    %198 = vmatpush.msra.mxu0 0.0
    %199 = vmatpush.msra.mxu0 0.0
    %200 = vmatpush.msra.mxu0 0.0
    %201 = vmatpush.msra.mxu0 0.0
    %202 = vmatpush.msra.mxu0 0.0
    %v203 = vand.u32 %v27, 4294901760
    %v204 = vsub.f32 %v27, %v203
    %v205 = vand.u32 %v204, 4294901760
    %206 = vmatpush.msra.mxu0 %v205
    %v207 = vand.u32 %v26, 4294901760
    %v208 = vsub.f32 %v26, %v207
    %v209 = vand.u32 %v208, 4294901760
    %210 = vmatpush.msra.mxu0 %v209
    %v211 = vand.u32 %v25, 4294901760
    %v212 = vsub.f32 %v25, %v211
    %v213 = vand.u32 %v212, 4294901760
    %214 = vmatpush.msra.mxu0 %v213
    %v215 = vand.u32 %v24, 4294901760
    %v216 = vsub.f32 %v24, %v215
    %v217 = vand.u32 %v216, 4294901760
    %218 = vmatpush.msra.mxu0 %v217
    %v219 = vand.u32 %v23, 4294901760
    %v220 = vsub.f32 %v23, %v219
    %v221 = vand.u32 %v220, 4294901760
    %222 = vmatpush.msra.mxu0 %v221
    %v223 = vand.u32 %v22, 4294901760
    %v224 = vsub.f32 %v22, %v223
    %v225 = vand.u32 %v224, 4294901760
    %226 = vmatpush.msra.mxu0 %v225
    %v227 = vand.u32 %v21, 4294901760
    %v228 = vsub.f32 %v21, %v227
    %v229 = vand.u32 %v228, 4294901760
    %230 = vmatpush.msra.mxu0 %v229
    %v231 = vand.u32 %v20, 4294901760
    %v232 = vsub.f32 %v20, %v231
    %v233 = vand.u32 %v232, 4294901760
    %234 = vmatpush.msra.mxu0 %v233
    %v235 = vand.u32 %v30, 4294901760
    %236 = vmatmul.f32.gmra.mxu0 %v235
    %v237 = vpop.f32.mrf.mxu0
    %v238 = vadd.f32 %v193, %v237
    %239 = vdwg.mxu0
    %240 = vmatpush.msra.mxu0 0.0
    %241 = vmatpush.msra.mxu0 0.0
    %242 = vmatpush.msra.mxu0 0.0
    %243 = vmatpush.msra.mxu0 0.0
    %244 = vmatpush.msra.mxu0 0.0
    %245 = vmatpush.msra.mxu0 0.0
    %246 = vmatpush.msra.mxu0 0.0
    %247 = vmatpush.msra.mxu0 0.0
    %v248 = vand.u32 %v27, 4294901760
    %249 = vmatpush.msra.mxu0 %v248
    %v250 = vand.u32 %v26, 4294901760
    %251 = vmatpush.msra.mxu0 %v250
    %v252 = vand.u32 %v25, 4294901760
    %253 = vmatpush.msra.mxu0 %v252
    %v254 = vand.u32 %v24, 4294901760
    %255 = vmatpush.msra.mxu0 %v254
    %v256 = vand.u32 %v23, 4294901760
    %257 = vmatpush.msra.mxu0 %v256
    %v258 = vand.u32 %v22, 4294901760
    %259 = vmatpush.msra.mxu0 %v258
    %v260 = vand.u32 %v21, 4294901760
    %261 = vmatpush.msra.mxu0 %v260
    %v262 = vand.u32 %v20, 4294901760
    %263 = vmatpush.msra.mxu0 %v262
    %v264 = vand.u32 %v30, 4294901760
    %265 = vmatmul.f32.gmra.mxu0 %v264
    %v266 = vpop.f32.mrf.mxu0
    %v267 = vadd.f32 %v238, %v266
    %268 = vdwg.mxu0
    %v269 = vrsqrt.pop %v267
    %v270 = vmul.f32 %v269, %v267
    %v271 = vmul.f32 %v270, %v269
    %v272 = vmul.f32 0.5, %v271
    %v273 = vsub.f32 1.5, %v272
    %v274 = vmul.f32 %v269, %v273
    %v275 = vmul.f32 %v267, %v274
    %vm276 = vcmp.eq.f32.partialorder %v267, inf
    %v277 = vsel %vm276, %v267, %v275
    %vm278 = vcmp.eq.f32.partialorder %v267, 0.0
    %v279 = vand.u32 %v267, 2147483648
    %v280 = vsel %vm278, %v279, %v277
    %v281 = vlaneseq
    %v282 = vand.u32 %v281, 127
    %vm283 = vcmask 25600
    %v284 = vsel %vm283, %v267, -inf
    %285 = vmax.xlane.f32.xlu0 %v284
    %v286 = vpop.xlane.xlu0 %285
    %vm287 = vcmp.ge.f32.partialorder %v267, %v286
    %v288 = vsel %vm287, %v282, 4
    %v289 = vsel %vm283, %v288, 2147483647
    %v290 = vand.u32 %v289, 65535
    %v291 = vshra.s32 %v289, 16
    %v292 = vcvt.s32.f32 %v290
    %v293 = vcvt.s32.f32 %v291
    %294 = vmin.xlane.f32.xlu0 %v293
    %v295 = vpop.xlane.xlu0 %294
    %vm296 = vcmp.eq.f32.partialorder %v293, %v295
    %v297 = vsel %vm296, %v292, inf
    %298 = vmin.xlane.f32.xlu0 %v297
    %v299 = vpop.xlane.xlu0 %298
    %v300 = vcvt.f32.s32 %v299
    %v301 = vcvt.f32.s32 %v295
    %v302 = vshll.u32 %v301, 16
    %v303 = vadd.s32 %v302, %v300
    %vm304 = vcmp.lt.s32.totalorder %v303, 3
    %v305 = vsel %vm304, %v303, 3
    %v306 = vld [vmem:[%s3] sm:$0x1]
    %v307 = vperm.slane %v306, 0
    %vm308 = vcmp.eq.s32.totalorder %v307, %v305
    %v309 = vsel %vm308, %v18, 0.0
    %v310 = vld [vmem:[%s2] sm:$0xff]
    %v311 = vld [vmem:[%s2 + $0x8] sm:$0xff]
    %v312 = vld [vmem:[%s2 + $0x10] sm:$0xff]
    %v313 = vld [vmem:[%s2 + $0x18] sm:$0xff]
    %v314 = vld [vmem:[%s2 + $0x20] sm:$0xff]
    %v315 = vld [vmem:[%s2 + $0x28] sm:$0xff]
    %v316 = vld [vmem:[%s2 + $0x30] sm:$0xff]
    %v317 = vld [vmem:[%s2 + $0x38] sm:$0xff]
    %v319 = vsel %vm28, %v309, 0
    %321 = vmatpush.msra.mxu0 0.0
    %322 = vmatpush.msra.mxu0 0.0
    %323 = vmatpush.msra.mxu0 0.0
    %324 = vmatpush.msra.mxu0 0.0
    %325 = vmatpush.msra.mxu0 0.0
    %326 = vmatpush.msra.mxu0 0.0
    %327 = vmatpush.msra.mxu0 0.0
    %328 = vmatpush.msra.mxu0 0.0
    %v329 = vand.u32 %v317, 4294901760
    %330 = vmatpush.msra.mxu0 %v329
    %v331 = vand.u32 %v316, 4294901760
    %332 = vmatpush.msra.mxu0 %v331
    %v333 = vand.u32 %v315, 4294901760
    %334 = vmatpush.msra.mxu0 %v333
    %v335 = vand.u32 %v314, 4294901760
    %336 = vmatpush.msra.mxu0 %v335
    %v337 = vand.u32 %v313, 4294901760
    %338 = vmatpush.msra.mxu0 %v337
    %v339 = vand.u32 %v312, 4294901760
    %340 = vmatpush.msra.mxu0 %v339
    %v341 = vand.u32 %v311, 4294901760
    %342 = vmatpush.msra.mxu0 %v341
    %v343 = vand.u32 %v310, 4294901760
    %344 = vmatpush.msra.mxu0 %v343
    %v345 = vand.u32 %v319, 4294901760
    %v346 = vsub.f32 %v319, %v345
    %v347 = vand.u32 %v346, 4294901760
    %v348 = vsub.f32 %v346, %v347
    %v349 = vand.u32 %v348, 4294901760
    %350 = vmatmul.f32.gmra.mxu0 %v349
    %v351 = vpop.f32.mrf.mxu0
    %v352 = vadd.f32 0.0, %v351
    %353 = vdwg.mxu0
    %354 = vmatpush.msra.mxu0 0.0
    %355 = vmatpush.msra.mxu0 0.0
    %356 = vmatpush.msra.mxu0 0.0
    %357 = vmatpush.msra.mxu0 0.0
    %358 = vmatpush.msra.mxu0 0.0
    %359 = vmatpush.msra.mxu0 0.0
    %360 = vmatpush.msra.mxu0 0.0
    %361 = vmatpush.msra.mxu0 0.0
    %v362 = vand.u32 %v317, 4294901760
    %v363 = vsub.f32 %v317, %v362
    %v364 = vand.u32 %v363, 4294901760
    %v365 = vsub.f32 %v363, %v364
    %v366 = vand.u32 %v365, 4294901760
    %367 = vmatpush.msra.mxu0 %v366
    %v368 = vand.u32 %v316, 4294901760
    %v369 = vsub.f32 %v316, %v368
    %v370 = vand.u32 %v369, 4294901760
    %v371 = vsub.f32 %v369, %v370
    %v372 = vand.u32 %v371, 4294901760
    %373 = vmatpush.msra.mxu0 %v372
    %v374 = vand.u32 %v315, 4294901760
    %v375 = vsub.f32 %v315, %v374
    %v376 = vand.u32 %v375, 4294901760
    %v377 = vsub.f32 %v375, %v376
    %v378 = vand.u32 %v377, 4294901760
    %379 = vmatpush.msra.mxu0 %v378
    %v380 = vand.u32 %v314, 4294901760
    %v381 = vsub.f32 %v314, %v380
    %v382 = vand.u32 %v381, 4294901760
    %v383 = vsub.f32 %v381, %v382
    %v384 = vand.u32 %v383, 4294901760
    %385 = vmatpush.msra.mxu0 %v384
    %v386 = vand.u32 %v313, 4294901760
    %v387 = vsub.f32 %v313, %v386
    %v388 = vand.u32 %v387, 4294901760
    %v389 = vsub.f32 %v387, %v388
    %v390 = vand.u32 %v389, 4294901760
    %391 = vmatpush.msra.mxu0 %v390
    %v392 = vand.u32 %v312, 4294901760
    %v393 = vsub.f32 %v312, %v392
    %v394 = vand.u32 %v393, 4294901760
    %v395 = vsub.f32 %v393, %v394
    %v396 = vand.u32 %v395, 4294901760
    %397 = vmatpush.msra.mxu0 %v396
    %v398 = vand.u32 %v311, 4294901760
    %v399 = vsub.f32 %v311, %v398
    %v400 = vand.u32 %v399, 4294901760
    %v401 = vsub.f32 %v399, %v400
    %v402 = vand.u32 %v401, 4294901760
    %403 = vmatpush.msra.mxu0 %v402
    %v404 = vand.u32 %v310, 4294901760
    %v405 = vsub.f32 %v310, %v404
    %v406 = vand.u32 %v405, 4294901760
    %v407 = vsub.f32 %v405, %v406
    %v408 = vand.u32 %v407, 4294901760
    %409 = vmatpush.msra.mxu0 %v408
    %v410 = vand.u32 %v319, 4294901760
    %411 = vmatmul.f32.gmra.mxu0 %v410
    %v412 = vpop.f32.mrf.mxu0
    %v413 = vadd.f32 %v352, %v412
    %414 = vdwg.mxu0
    %415 = vmatpush.msra.mxu0 0.0
    %416 = vmatpush.msra.mxu0 0.0
    %417 = vmatpush.msra.mxu0 0.0
    %418 = vmatpush.msra.mxu0 0.0
    %419 = vmatpush.msra.mxu0 0.0
    %420 = vmatpush.msra.mxu0 0.0
    %421 = vmatpush.msra.mxu0 0.0
    %422 = vmatpush.msra.mxu0 0.0
    %v423 = vand.u32 %v317, 4294901760
    %v424 = vsub.f32 %v317, %v423
    %425 = vmatpush.msra.mxu0 %v424
    %v426 = vand.u32 %v316, 4294901760
    %v427 = vsub.f32 %v316, %v426
    %428 = vmatpush.msra.mxu0 %v427
    %v429 = vand.u32 %v315, 4294901760
    %v430 = vsub.f32 %v315, %v429
    %431 = vmatpush.msra.mxu0 %v430
    %v432 = vand.u32 %v314, 4294901760
    %v433 = vsub.f32 %v314, %v432
    %434 = vmatpush.msra.mxu0 %v433
    %v435 = vand.u32 %v313, 4294901760
    %v436 = vsub.f32 %v313, %v435
    %437 = vmatpush.msra.mxu0 %v436
    %v438 = vand.u32 %v312, 4294901760
    %v439 = vsub.f32 %v312, %v438
    %440 = vmatpush.msra.mxu0 %v439
    %v441 = vand.u32 %v311, 4294901760
    %v442 = vsub.f32 %v311, %v441
    %443 = vmatpush.msra.mxu0 %v442
    %v444 = vand.u32 %v310, 4294901760
    %v445 = vsub.f32 %v310, %v444
    %446 = vmatpush.msra.mxu0 %v445
    %v447 = vand.u32 %v319, 4294901760
    %v448 = vsub.f32 %v319, %v447
    %449 = vmatmul.f32.gmra.mxu0 %v448
    %v450 = vpop.f32.mrf.mxu0
    %v451 = vadd.f32 %v413, %v450
    %452 = vdwg.mxu0
    %453 = vmatpush.msra.mxu0 0.0
    %454 = vmatpush.msra.mxu0 0.0
    %455 = vmatpush.msra.mxu0 0.0
    %456 = vmatpush.msra.mxu0 0.0
    %457 = vmatpush.msra.mxu0 0.0
    %458 = vmatpush.msra.mxu0 0.0
    %459 = vmatpush.msra.mxu0 0.0
    %460 = vmatpush.msra.mxu0 0.0
    %v461 = vand.u32 %v317, 4294901760
    %462 = vmatpush.msra.mxu0 %v461
    %v463 = vand.u32 %v316, 4294901760
    %464 = vmatpush.msra.mxu0 %v463
    %v465 = vand.u32 %v315, 4294901760
    %466 = vmatpush.msra.mxu0 %v465
    %v467 = vand.u32 %v314, 4294901760
    %468 = vmatpush.msra.mxu0 %v467
    %v469 = vand.u32 %v313, 4294901760
    %470 = vmatpush.msra.mxu0 %v469
    %v471 = vand.u32 %v312, 4294901760
    %472 = vmatpush.msra.mxu0 %v471
    %v473 = vand.u32 %v311, 4294901760
    %474 = vmatpush.msra.mxu0 %v473
    %v475 = vand.u32 %v310, 4294901760
    %476 = vmatpush.msra.mxu0 %v475
    %v477 = vand.u32 %v319, 4294901760
    %v478 = vsub.f32 %v319, %v477
    %v479 = vand.u32 %v478, 4294901760
    %480 = vmatmul.f32.gmra.mxu0 %v479
    %v481 = vpop.f32.mrf.mxu0
    %v482 = vadd.f32 %v451, %v481
    %483 = vdwg.mxu0
    %484 = vmatpush.msra.mxu0 0.0
    %485 = vmatpush.msra.mxu0 0.0
    %486 = vmatpush.msra.mxu0 0.0
    %487 = vmatpush.msra.mxu0 0.0
    %488 = vmatpush.msra.mxu0 0.0
    %489 = vmatpush.msra.mxu0 0.0
    %490 = vmatpush.msra.mxu0 0.0
    %491 = vmatpush.msra.mxu0 0.0
    %v492 = vand.u32 %v317, 4294901760
    %v493 = vsub.f32 %v317, %v492
    %v494 = vand.u32 %v493, 4294901760
    %495 = vmatpush.msra.mxu0 %v494
    %v496 = vand.u32 %v316, 4294901760
    %v497 = vsub.f32 %v316, %v496
    %v498 = vand.u32 %v497, 4294901760
    %499 = vmatpush.msra.mxu0 %v498
    %v500 = vand.u32 %v315, 4294901760
    %v501 = vsub.f32 %v315, %v500
    %v502 = vand.u32 %v501, 4294901760
    %503 = vmatpush.msra.mxu0 %v502
    %v504 = vand.u32 %v314, 4294901760
    %v505 = vsub.f32 %v314, %v504
    %v506 = vand.u32 %v505, 4294901760
    %507 = vmatpush.msra.mxu0 %v506
    %v508 = vand.u32 %v313, 4294901760
    %v509 = vsub.f32 %v313, %v508
    %v510 = vand.u32 %v509, 4294901760
    %511 = vmatpush.msra.mxu0 %v510
    %v512 = vand.u32 %v312, 4294901760
    %v513 = vsub.f32 %v312, %v512
    %v514 = vand.u32 %v513, 4294901760
    %515 = vmatpush.msra.mxu0 %v514
    %v516 = vand.u32 %v311, 4294901760
    %v517 = vsub.f32 %v311, %v516
    %v518 = vand.u32 %v517, 4294901760
    %519 = vmatpush.msra.mxu0 %v518
    %v520 = vand.u32 %v310, 4294901760
    %v521 = vsub.f32 %v310, %v520
    %v522 = vand.u32 %v521, 4294901760
    %523 = vmatpush.msra.mxu0 %v522
    %v524 = vand.u32 %v319, 4294901760
    %525 = vmatmul.f32.gmra.mxu0 %v524
    %v526 = vpop.f32.mrf.mxu0
    %v527 = vadd.f32 %v482, %v526
    %528 = vdwg.mxu0
    %529 = vmatpush.msra.mxu0 0.0
    %530 = vmatpush.msra.mxu0 0.0
    %531 = vmatpush.msra.mxu0 0.0
    %532 = vmatpush.msra.mxu0 0.0
    %533 = vmatpush.msra.mxu0 0.0
    %534 = vmatpush.msra.mxu0 0.0
    %535 = vmatpush.msra.mxu0 0.0
    %536 = vmatpush.msra.mxu0 0.0
    %v537 = vand.u32 %v317, 4294901760
    %538 = vmatpush.msra.mxu0 %v537
    %v539 = vand.u32 %v316, 4294901760
    %540 = vmatpush.msra.mxu0 %v539
    %v541 = vand.u32 %v315, 4294901760
    %542 = vmatpush.msra.mxu0 %v541
    %v543 = vand.u32 %v314, 4294901760
    %544 = vmatpush.msra.mxu0 %v543
    %v545 = vand.u32 %v313, 4294901760
    %546 = vmatpush.msra.mxu0 %v545
    %v547 = vand.u32 %v312, 4294901760
    %548 = vmatpush.msra.mxu0 %v547
    %v549 = vand.u32 %v311, 4294901760
    %550 = vmatpush.msra.mxu0 %v549
    %v551 = vand.u32 %v310, 4294901760
    %552 = vmatpush.msra.mxu0 %v551
    %v553 = vand.u32 %v319, 4294901760
    %554 = vmatmul.f32.gmra.mxu0 %v553
    %v555 = vpop.f32.mrf.mxu0
    %v556 = vadd.f32 %v527, %v555
    %557 = vdwg.mxu0
    %558 = vst [vmem:[#allocation2] sm:$0x3] 0.0
    %vm559 = vcmask 123904
    %560 = vst.msk [vmem:[#allocation2] sm:$0x3] %vm559, %v556
    %562 = vrot.lane.b32.xlu0 %v280, 16
    %v563 = vpop.permute.xlu0 %562
    %vm565 = vcmask 156800
    %566 = vst.msk [vmem:[#allocation2] sm:$0x3] %vm565, %v563
    %v567 = vcvt.s32.f32 %v305
    %vm568 = vcmask 165024
    %569 = vst.msk [vmem:[#allocation2] sm:$0x3] %vm568, %v567
    // Predicated region
    $region18: #{tpu_custom_call.1} parent=1 // pred_check
      _
    $region19: #{tpu_custom_call.1} parent=1 // pred_check_branch
      %571 = sbr.rel (0) target = $region21
    $region20: #{tpu_custom_call.1} parent=1 // pred_region
      %573 = vsyncadd [#allocation3], 0
      %s575 = sshll.u32 [#allocation2], 4
      %s576 = int_to_ptr.vmem [resolvable:$true] %s575
      %s577 = sshll.u32 %s4, 4
      %s578 = int_to_ptr.hbm [resolvable:$true] %s577
      %580 = dma.vmem_to_hbm [thread:$0]  %s576, 32, %s578, [#allocation3]
    $region21: #{tpu_custom_call.1} parent=1 // pred_fallthru
      _
    // Predicated region
    $region22: #{tpu_custom_call.1} parent=1 // pred_check
      _
    $region23: #{tpu_custom_call.1} parent=1 // pred_check_branch
      %582 = sbr.rel (0) target = $region25
    $region24: #{tpu_custom_call.1} parent=1 // pred_region
      %584 = dma.done [#allocation3], 32
    $region25: #{tpu_custom_call.1} parent=1 // pred_fallthru
      _
    %585 = vsyncpa [#allocation3], 1

</llo_original>
